<compile_context>
chip_gen: v5e
topology: v5e:2x2
jax: 0.10.0
libtpu: 0.0.40
codegen_flags: <defaults>
</compile_context>

<pallas_src>
import functools

import jax
import jax.numpy as jnp
import numpy as np
from jax import lax
from jax.experimental import pallas as pl
from jax.experimental.pallas import tpu as pltpu


_LANES_CANDIDATES = (512, 1024, 256, 2048, 128)  # lane width: largest-ish divisor of n
_MAX_TILE_ELEMS = 512 * 1024                     # 2 MiB f32 per pipeline buffer
_PAD_LOGIT = -100.0                              # fallback pad: focal contribution == 0


def _round_up(x, m):
    return ((x + m - 1) // m) * m


def _num_tensorcores():
    """Best-effort TensorCore count of the local chip (1 on v5e/v6e, 2 on v7x)."""
    try:
        info = pltpu.get_tpu_info()
    except Exception:
        return 1
    for name in ("num_cores", "num_tensorcores", "tensorcore_count",
                 "num_cores_per_chip", "cores_per_chip"):
        v = getattr(info, name, None)
        if isinstance(v, int) and v >= 1:
            return min(int(v), 2)
    return 1


def _focal_loss_kernel(x_ref, t_ref, out_ref, acc_ref, *,
                       gamma, steps_per_shard, total_blocks, valid_tail_rows, ragged):
    i = pl.program_id(1)

    @pl.when(i == 0)
    def _init():
        acc_ref[...] = jnp.zeros_like(acc_ref)

    # Native-dtype loads (bf16/int8/bool stay narrow on the wire), f32 in VMEM.
    x = x_ref[...].astype(jnp.float32)
    t = t_ref[...].astype(jnp.float32)

    # Numerically stable binary_cross_entropy_with_logits (reduction='none',
    # pos_weight=None): bce = max(x,0) - x*t + log1p(exp(-|x|))
    bce = jnp.maximum(x, 0.0) - x * t + jnp.log1p(jnp.exp(-jnp.abs(x)))
    # pt = exp(-bce) exactly as the torch module does (3 EUP pushes/elem total).
    pt = jnp.exp(-bce)
    one_m_pt = 1.0 - pt

    g = float(gamma)
    if g == 2.0:                                   # module default: plain square
        mod = one_m_pt * one_m_pt
    elif g == float(int(g)) and 0.0 <= g <= 4.0:   # other small integer gammas
        mod = jnp.ones_like(one_m_pt)
        for _ in range(int(g)):
            mod = mod * one_m_pt
    else:                                          # general (non-integer) gamma
        mod = jnp.power(one_m_pt, jnp.float32(g))
    focal = mod * bce

    if ragged:
        # The last row-block overhangs the (un-padded) input: rows past the end
        # hold garbage (possibly NaN/Inf) and must be selected away, never
        # multiplied.  Only the tail block pays for the mask.
        block_idx = pl.program_id(0) * steps_per_shard + i
        is_tail = block_idx == total_blocks - 1

        @pl.when(block_idx != total_blocks - 1)
        def _acc_body():
            acc_ref[...] += focal

        @pl.when(is_tail)
        def _acc_tail():
            row_ids = lax.broadcasted_iota(jnp.int32, focal.shape, 0)
            acc_ref[...] += jnp.where(row_ids < valid_tail_rows, focal, 0.0)
    else:
        acc_ref[...] += focal

    @pl.when(i == pl.num_programs(1) - 1)
    def _finalize():
        out_ref[0, 0] = jnp.sum(acc_ref[...])


def focal_loss(logits, targets, *, gamma=2.0):
    """Focal loss with reduction='mean', alpha=None, pos_weight=None."""
    # TODO(synk): alpha scaling, pos_weight and reduction in {'sum','none'} are not
    # implemented (module defaults only).
    assert logits.shape == targets.shape
    n_valid = int(np.prod(logits.shape))
    assert n_valid > 0

    logits_flat = logits.reshape(-1)     # free bitcast reshape, native dtype kept
    targets_flat = targets.reshape(-1)

    lanes = next((c for c in _LANES_CANDIDATES if n_valid % c == 0), None)
    if lanes is None:
        # TODO(synk): element counts not divisible by 128 still take a one-off pad
        # copy (neutral element -> focal contribution exactly 0); all 128-aligned
        # sizes stream straight out of HBM with no copy.
        lanes = 512
        pad = _round_up(n_valid, lanes) - n_valid
        logits_flat = jnp.pad(logits_flat, (0, pad), constant_values=_PAD_LOGIT)
        targets_flat = jnp.pad(targets_flat, (0, pad), constant_values=0)
    n_elems = logits_flat.shape[0]
    rows = n_elems // lanes
    logits2d = logits_flat.reshape(rows, lanes)
    targets2d = targets_flat.reshape(rows, lanes)

    # 32-sublane granularity so bf16/int8 inputs need no relayout; 512K-elem tiles.
    tm_cap = max(32, (_MAX_TILE_ELEMS // lanes) // 32 * 32)
    tm = min(tm_cap, _round_up(rows, 32))
    total_blocks = -(-rows // tm)
    ragged = (rows % tm) != 0
    valid_tail_rows = rows - (total_blocks - 1) * tm

    # Real 2-TensorCore split only where it exists (v7x); otherwise 1 shard.
    cores = _num_tensorcores()
    num_shards = cores if (cores > 1 and total_blocks % cores == 0) else 1
    steps_per_shard = total_blocks // num_shards

    if num_shards > 1:
        dim_sem = (getattr(pltpu, "CORE_PARALLEL", "parallel"),
                   getattr(pltpu, "ARBITRARY", "arbitrary"))
    else:
        dim_sem = ("arbitrary", "arbitrary")

    kernel = functools.partial(
        _focal_loss_kernel,
        gamma=float(gamma),
        steps_per_shard=steps_per_shard,
        total_blocks=total_blocks,
        valid_tail_rows=valid_tail_rows,
        ragged=ragged,
    )

    def in_map(c, i):
        return (c * steps_per_shard + i, 0)

    cost = pl.CostEstimate(
        flops=10 * n_elems,
        transcendentals=3 * n_elems,
        bytes_accessed=(logits2d.size * logits2d.dtype.itemsize
                        + targets2d.size * targets2d.dtype.itemsize
                        + num_shards * 4),
    )

    partial_sums = pl.pallas_call(
        kernel,
        out_shape=jax.ShapeDtypeStruct((num_shards, 1), jnp.float32),
        grid_spec=pltpu.PrefetchScalarGridSpec(
            num_scalar_prefetch=0,
            grid=(num_shards, steps_per_shard),
            in_specs=[
                pl.BlockSpec((tm, lanes), in_map),
                pl.BlockSpec((tm, lanes), in_map),
            ],
            out_specs=pl.BlockSpec((1, 1), lambda c, i: (c, 0),
                                   memory_space=pltpu.SMEM),
            scratch_shapes=[pltpu.VMEM((tm, lanes), jnp.float32)],
        ),
        compiler_params=pltpu.CompilerParams(
            dimension_semantics=dim_sem,
            vmem_limit_bytes=32 * 1024 * 1024,
        ),
        cost_estimate=cost,
    )(logits2d, targets2d)

    return jnp.sum(partial_sums) / jnp.float32(n_valid)


def _focal_loss_ref(logits, targets, gamma=2.0):
    x = logits.astype(jnp.float32)
    t = targets.astype(jnp.float32)
    bce = jnp.maximum(x, 0.0) - x * t + jnp.log1p(jnp.exp(-jnp.abs(x)))
    pt = jnp.exp(-bce)
    return jnp.mean((1.0 - pt) ** gamma * bce)


if __name__ == "__main__":
    key = jax.random.PRNGKey(0)
    k1, k2 = jax.random.split(key)

    shape = (2, 4, 16, 16)  # N, C, H, W multi-label logits
    logits = jax.random.normal(k1, shape, dtype=jnp.float32) * 2.0
    targets = (jax.random.uniform(k2, shape) > 0.5).astype(jnp.float32)

    loss = jax.block_until_ready(focal_loss(logits, targets, gamma=2.0))
    ref = jax.block_until_ready(_focal_loss_ref(logits, targets, gamma=2.0))

    np.testing.assert_allclose(np.asarray(loss), np.asarray(ref),
                               rtol=2e-5, atol=2e-6)
    print("KERNEL_OK")
</pallas_src>

<mosaic_0001>
module attributes {stable_mosaic.version = 11 : i64} {
  func.func @_focal_loss_kernel(%arg0: i32, %arg1: i32, %arg2: memref<32x512xf32, #tpu.memory_space<vmem>>, %arg3: memref<32x512xf32, #tpu.memory_space<vmem>>, %arg4: memref<1x1xf32, #tpu.memory_space<smem>>, %arg5: memref<32x512xf32, #tpu.memory_space<vmem>>) attributes {dimension_semantics = [#tpu.dimension_semantics<arbitrary>, #tpu.dimension_semantics<arbitrary>], iteration_bounds = array<i64: 1, 1>, scalar_prefetch = 0 : i64, scratch_operands = 1 : i64, tpu.core_type = #tpu.core_type<tc>, window_params = [{transform_indices = @transform_0, window_bounds = array<i64: 32, 512>}, {transform_indices = @transform_1, window_bounds = array<i64: 32, 512>}, {transform_indices = @transform_2, window_bounds = array<i64: 1, 1>}]} {
    %c0_i32 = arith.constant 0 : i32
    %0 = arith.cmpi eq, %arg1, %c0_i32 : i32
    %1 = arith.extui %0 : i1 to i32
    %c0_i32_0 = arith.constant 0 : i32
    %2 = arith.cmpi ne, %1, %c0_i32_0 : i32
    scf.if %2 {
      %cst_13 = arith.constant 0.000000e+00 : f32
      %33 = vector.broadcast %cst_13 : f32 to vector<32x512xf32>
      %c0_14 = arith.constant 0 : index
      %c0_15 = arith.constant 0 : index
      %34 = vector.load %arg5[%c0_14, %c0_15] : memref<32x512xf32, #tpu.memory_space<vmem>>, vector<32x512xf32>
      tpu.vector_store %arg5[%c0_14, %c0_15], %33 {strides = array<i32>} : memref<32x512xf32, #tpu.memory_space<vmem>>, vector<32x512xf32>,
    } else {
    }
    %c0 = arith.constant 0 : index
    %c0_1 = arith.constant 0 : index
    %3 = vector.load %arg2[%c0, %c0_1] : memref<32x512xf32, #tpu.memory_space<vmem>>, vector<32x512xf32>
    %c0_2 = arith.constant 0 : index
    %c0_3 = arith.constant 0 : index
    %4 = vector.load %arg3[%c0_2, %c0_3] : memref<32x512xf32, #tpu.memory_space<vmem>>, vector<32x512xf32>
    %cst = arith.constant 0.000000e+00 : f32
    %5 = vector.broadcast %cst : f32 to vector<32x512xf32>
    %6 = arith.maximumf %3, %5 : vector<32x512xf32>
    %7 = arith.mulf %3, %4 : vector<32x512xf32>
    %8 = arith.subf %6, %7 : vector<32x512xf32>
    %9 = math.absf %3 : vector<32x512xf32>
    %cst_4 = arith.constant 0.000000e+00 : f32
    %10 = vector.broadcast %cst_4 : f32 to vector<32x512xf32>
    %11 = arith.subf %10, %9 : vector<32x512xf32>
    %12 = math.exp %11 : vector<32x512xf32>
    %13 = math.log1p %12 : vector<32x512xf32>
    %14 = arith.addf %8, %13 : vector<32x512xf32>
    %cst_5 = arith.constant 0.000000e+00 : f32
    %15 = vector.broadcast %cst_5 : f32 to vector<32x512xf32>
    %16 = arith.subf %15, %14 : vector<32x512xf32>
    %17 = math.exp %16 : vector<32x512xf32>
    %cst_6 = arith.constant 1.000000e+00 : f32
    %18 = vector.broadcast %cst_6 : f32 to vector<32x512xf32>
    %19 = arith.subf %18, %17 : vector<32x512xf32>
    %20 = arith.mulf %19, %19 : vector<32x512xf32>
    %21 = arith.mulf %20, %14 : vector<32x512xf32>
    %c1_i32 = arith.constant 1 : i32
    %22 = arith.muli %arg0, %c1_i32 : i32
    %23 = arith.addi %22, %arg1 : i32
    %c0_i32_7 = arith.constant 0 : i32
    %24 = arith.cmpi eq, %23, %c0_i32_7 : i32
    %c0_i32_8 = arith.constant 0 : i32
    %25 = arith.cmpi ne, %23, %c0_i32_8 : i32
    %26 = arith.extui %25 : i1 to i32
    %c0_i32_9 = arith.constant 0 : i32
    %27 = arith.cmpi ne, %26, %c0_i32_9 : i32
    scf.if %27 {
      %c0_13 = arith.constant 0 : index
      %c0_14 = arith.constant 0 : index
      %33 = vector.load %arg5[%c0_13, %c0_14] : memref<32x512xf32, #tpu.memory_space<vmem>>, vector<32x512xf32>
      %34 = arith.addf %33, %21 : vector<32x512xf32>
      %c0_15 = arith.constant 0 : index
      %c0_16 = arith.constant 0 : index
      %35 = vector.load %arg5[%c0_15, %c0_16] : memref<32x512xf32, #tpu.memory_space<vmem>>, vector<32x512xf32>
      tpu.vector_store %arg5[%c0_15, %c0_16], %34 {strides = array<i32>} : memref<32x512xf32, #tpu.memory_space<vmem>>, vector<32x512xf32>,
    } else {
    }
    %28 = arith.extui %24 : i1 to i32
    %c0_i32_10 = arith.constant 0 : i32
    %29 = arith.cmpi ne, %28, %c0_i32_10 : i32
    scf.if %29 {
      %33 = tpu.iota {dimensions = array<i32: 0>} : vector<32x512xi32>
      %c0_13 = arith.constant 0 : index
      %c0_14 = arith.constant 0 : index
      %34 = vector.load %arg5[%c0_13, %c0_14] : memref<32x512xf32, #tpu.memory_space<vmem>>, vector<32x512xf32>
      %c4_i32 = arith.constant 4 : i32
      %35 = vector.broadcast %c4_i32 : i32 to vector<32x512xi32>
      %36 = arith.cmpi slt, %33, %35 : vector<32x512xi32>
      %cst_15 = arith.constant 0.000000e+00 : f32
      %37 = vector.broadcast %cst_15 : f32 to vector<32x512xf32>
      %38 = arith.select %36, %21, %37 : vector<32x512xi1>, vector<32x512xf32>
      %39 = arith.addf %34, %38 : vector<32x512xf32>
      %c0_16 = arith.constant 0 : index
      %c0_17 = arith.constant 0 : index
      %40 = vector.load %arg5[%c0_16, %c0_17] : memref<32x512xf32, #tpu.memory_space<vmem>>, vector<32x512xf32>
      tpu.vector_store %arg5[%c0_16, %c0_17], %39 {strides = array<i32>} : memref<32x512xf32, #tpu.memory_space<vmem>>, vector<32x512xf32>,
    } else {
    }
    %c0_i32_11 = arith.constant 0 : i32
    %30 = arith.cmpi eq, %arg1, %c0_i32_11 : i32
    %31 = arith.extui %30 : i1 to i32
    %c0_i32_12 = arith.constant 0 : i32
    %32 = arith.cmpi ne, %31, %c0_i32_12 : i32
    scf.if %32 {
      %c0_13 = arith.constant 0 : index
      %c0_14 = arith.constant 0 : index
      %33 = vector.load %arg5[%c0_13, %c0_14] : memref<32x512xf32, #tpu.memory_space<vmem>>, vector<32x512xf32>
      %34 = vector.shape_cast %33 : vector<32x512xf32> to vector<1x32x512xf32>
      %cst_15 = arith.constant dense<0.000000e+00> : vector<1xf32>
      %35 = vector.multi_reduction <add>, %34, %cst_15 [1, 2] : vector<1x32x512xf32> to vector<1xf32>
      %36 = vector.shape_cast %35 : vector<1xf32> to vector<1x1x1xf32>
      %37 = vector.extract %36[0, 0, 0] : f32 from vector<1x1x1xf32>
      %c0_16 = arith.constant 0 : index
      %c0_17 = arith.constant 0 : index
      %38 = memref.load %arg4[%c0_16, %c0_17] : memref<1x1xf32, #tpu.memory_space<smem>>
      memref.store %37, %arg4[%c0_16, %c0_17] : memref<1x1xf32, #tpu.memory_space<smem>>
    } else {
    }
    return
  }
  func.func @transform_0(%arg0: i32, %arg1: i32) -> (i32, i32) {
    %c1_i32 = arith.constant 1 : i32
    %0 = arith.muli %arg0, %c1_i32 : i32
    %1 = arith.addi %0, %arg1 : i32
    %c0_i32 = arith.constant 0 : i32
    %c0_i32_0 = arith.constant 0 : i32
    return %1, %c0_i32 : i32, i32
  }
  func.func @transform_1(%arg0: i32, %arg1: i32) -> (i32, i32) {
    %c1_i32 = arith.constant 1 : i32
    %0 = arith.muli %arg0, %c1_i32 : i32
    %1 = arith.addi %0, %arg1 : i32
    %c0_i32 = arith.constant 0 : i32
    %c0_i32_0 = arith.constant 0 : i32
    return %1, %c0_i32 : i32, i32
  }
  func.func @transform_2(%arg0: i32, %arg1: i32) -> (i32, i32) {
    %c0_i32 = arith.constant 0 : i32
    %c0_i32_0 = arith.constant 0 : i32
    return %arg0, %c0_i32 : i32, i32
  }
}

</mosaic_0001>

<llo_original>
// kernel: tpu_custom_call.1
$region0: #{tpu_custom_call.1}
  #allocation0 [shape = 'u32[]', space=smem, size = 0x4, offset = 0x4, fixed_abs, tag = 'smem constant byte address 0x4 - core index']
  #allocation1 [shape = 'u32[72,128]{1,0:T(1,128)}', space=vmem, size = 0x9000, scoped, tag = 'internal scratch']
  #allocation2 [shape = 'f32[32,512]{1,0:T(8,128)}', space=vmem, size = 0x10000, scoped, tag = 'scratch operand']
  %s0 = inlined_call_operand.hbm [shape: f32[4,512], index: 0, kind: input, shape index: {}]
  %s1 = inlined_call_operand.hbm [shape: f32[4,512], index: 1, kind: input, shape index: {}]
  %s2 = inlined_call_operand.hbm [shape: f32[1,1], index: 2, kind: output, shape index: {}]
  %s3 = sld [smem:[#allocation0]]
  $region42: #{tpu_custom_call.1} parent=0
    _
  %s5 = ssub.s32 1, %s3
  %s6 = scalar_select 0, %s5, %s3
  $region1: #{tpu_custom_call.1} parent=0
    #allocation3 [shape = 'u8[65536]{0}', space=vmem, size = 0x10000, scoped, tag = 'input window, operand 0, single buffered']
    #allocation4 [shape = 's32[1]{0}', space=sflag, size = 0x4, scoped, tag = 'scoped memory for tpu_custom_call.1']
    #allocation5 [shape = 's32[1]{0}', space=sflag, size = 0x4, scoped, tag = 'scoped memory for tpu_custom_call.1']
    #allocation6 [shape = 'u8[65536]{0}', space=vmem, size = 0x10000, scoped, tag = 'input window, operand 1, single buffered']
    #allocation7 [shape = 's32[1]{0}', space=sflag, size = 0x4, scoped, tag = 'scoped memory for tpu_custom_call.1']
    #allocation8 [shape = 'u8[512]{0}', space=smem, size = 0x200, scoped, tag = 'output window, operand 0, single buffered']
    %7 = vsyncpa [#allocation4], 0
    %8 = vsyncpa [#allocation7], 0
    %9 = vsyncpa [#allocation5], 0
    // Predicated region
    $region2: #{tpu_custom_call.1} parent=1 // pred_check
      _
    $region3: #{tpu_custom_call.1} parent=1 // pred_check_branch
      %11 = sbr.rel (0) target = $region5
    $region4: #{tpu_custom_call.1} parent=1 // pred_region
      %s12 = sadd.s32 0, 0
      %s13 = smul.u32 8, %s12
      %s14 = ssub.s32 1, %s13
      %s15 = smul.u32 4, %s14
      %s16 = smul.u32 %s15, 4
      %s17 = ssub.s32 128, %s16
      %s18 = sshll.u32 %s17, 4
      %19 = vsyncadd [#allocation4], %s18
      %p20 = scmp.ne.s32.totalorder 0, %s16
      %s21 = smul.addr %s13, 4
      %s22 = smul.addr %s21, 4
      %s23 = scalar_lea.hbm %s0, %s22
      %s24 = smul.u32 16, %s14
      %s25 = sshll.u32 %s23, 4
      %s26 = int_to_ptr.hbm [resolvable:$true] %s25
      %s27 = sshll.u32 [#allocation3], 4
      %s28 = int_to_ptr.vmem [resolvable:$true] %s27
      %s29 = sshll.u32 %s24, 4
      %33 = dma.hbm_to_vmem [thread:$0]  (%p20), %s26, %s29, %s28, [#allocation4], 256, 256, 16
    $region5: #{tpu_custom_call.1} parent=1 // pred_fallthru
      _
    // Predicated region
    $region6: #{tpu_custom_call.1} parent=1 // pred_check
      _
    $region7: #{tpu_custom_call.1} parent=1 // pred_check_branch
      %35 = sbr.rel (0) target = $region9
    $region8: #{tpu_custom_call.1} parent=1 // pred_region
      %s36 = sadd.s32 0, 0
      %s37 = smul.u32 8, %s36
      %s38 = ssub.s32 1, %s37
      %s39 = smul.u32 4, %s38
      %s40 = smul.u32 %s39, 4
      %s41 = ssub.s32 128, %s40
      %s42 = sshll.u32 %s41, 4
      %43 = vsyncadd [#allocation7], %s42
      %p44 = scmp.ne.s32.totalorder 0, %s40
      %s45 = smul.addr %s37, 4
      %s46 = smul.addr %s45, 4
      %s47 = scalar_lea.hbm %s1, %s46
      %s48 = smul.u32 16, %s38
      %s49 = sshll.u32 %s47, 4
      %s50 = int_to_ptr.hbm [resolvable:$true] %s49
      %s51 = sshll.u32 [#allocation6], 4
      %s52 = int_to_ptr.vmem [resolvable:$true] %s51
      %s53 = sshll.u32 %s48, 4
      %57 = dma.hbm_to_vmem [thread:$0]  (%p44), %s50, %s53, %s52, [#allocation7], 256, 256, 16
    $region9: #{tpu_custom_call.1} parent=1 // pred_fallthru
      _
    // Predicated region
    $region10: #{tpu_custom_call.1} parent=1 // pred_check
      _
    $region11: #{tpu_custom_call.1} parent=1 // pred_check_branch
      %59 = sbr.rel (0) target = $region13
    $region12: #{tpu_custom_call.1} parent=1 // pred_region
      %61 = dma.done [#allocation4], 2048
    $region13: #{tpu_custom_call.1} parent=1 // pred_fallthru
      _
    // Predicated region
    $region14: #{tpu_custom_call.1} parent=1 // pred_check
      _
    $region15: #{tpu_custom_call.1} parent=1 // pred_check_branch
      %63 = sbr.rel (0) target = $region17
    $region16: #{tpu_custom_call.1} parent=1 // pred_region
      %65 = dma.done [#allocation7], 2048
    $region17: #{tpu_custom_call.1} parent=1 // pred_fallthru
      _
    %s66 = sadd.s32 0, 0
    %s67 = smul.u32 8, %s66
    %s68 = ssub.s32 1, %s67
    %s69 = smul.u32 4, %s68
    %s70 = smul.u32 %s69, 4
    %s71 = sadd.s32 0, 0
    %s72 = smul.u32 8, %s71
    %s73 = ssub.s32 1, %s72
    %s74 = smul.u32 4, %s73
    %s75 = smul.u32 %s74, 4
    %p76 = scmp.eq.s32.totalorder 0, 0
    // Predicated region
    $region18: #{tpu_custom_call.1} parent=1 // pred_check
      %p77 = pneg %p76
    $region19: #{tpu_custom_call.1} parent=1 // pred_check_branch
      %79 = sbr.rel (%p77) target = $region21
    $region20: #{tpu_custom_call.1} parent=1 // pred_region
      %80 = vst [vmem:[#allocation2] sm:$0xff] 0.0
      %81 = vst [vmem:[#allocation2 + $0x8] sm:$0xff] 0.0
      %82 = vst [vmem:[#allocation2 + $0x10] sm:$0xff] 0.0
      %83 = vst [vmem:[#allocation2 + $0x18] sm:$0xff] 0.0
      %84 = vst [vmem:[#allocation2 + $0x20] sm:$0xff] 0.0
      %85 = vst [vmem:[#allocation2 + $0x28] sm:$0xff] 0.0
      %86 = vst [vmem:[#allocation2 + $0x30] sm:$0xff] 0.0
      %87 = vst [vmem:[#allocation2 + $0x38] sm:$0xff] 0.0
      %88 = vst [vmem:[#allocation2 + $0x40] sm:$0xff] 0.0
      %89 = vst [vmem:[#allocation2 + $0x48] sm:$0xff] 0.0
      %90 = vst [vmem:[#allocation2 + $0x50] sm:$0xff] 0.0
      %91 = vst [vmem:[#allocation2 + $0x58] sm:$0xff] 0.0
      %92 = vst [vmem:[#allocation2 + $0x60] sm:$0xff] 0.0
      %93 = vst [vmem:[#allocation2 + $0x68] sm:$0xff] 0.0
      %94 = vst [vmem:[#allocation2 + $0x70] sm:$0xff] 0.0
      %95 = vst [vmem:[#allocation2 + $0x78] sm:$0xff] 0.0
    $region21: #{tpu_custom_call.1} parent=1 // pred_fallthru
      _
    %v96 = vld [vmem:[#allocation3] sm:$0xff]
    %v97 = vld [vmem:[#allocation3 + $0x8] sm:$0xff]
    %v98 = vld [vmem:[#allocation3 + $0x10] sm:$0xff]
    %v99 = vld [vmem:[#allocation3 + $0x18] sm:$0xff]
    %v100 = vld [vmem:[#allocation3 + $0x20] sm:$0xff]
    %v101 = vld [vmem:[#allocation3 + $0x28] sm:$0xff]
    %v102 = vld [vmem:[#allocation3 + $0x30] sm:$0xff]
    %v103 = vld [vmem:[#allocation3 + $0x38] sm:$0xff]
    %v104 = vld [vmem:[#allocation3 + $0x40] sm:$0xff]
    %v105 = vld [vmem:[#allocation3 + $0x48] sm:$0xff]
    %v106 = vld [vmem:[#allocation3 + $0x50] sm:$0xff]
    %v107 = vld [vmem:[#allocation3 + $0x58] sm:$0xff]
    %v108 = vld [vmem:[#allocation3 + $0x60] sm:$0xff]
    %v109 = vld [vmem:[#allocation3 + $0x68] sm:$0xff]
    %v110 = vld [vmem:[#allocation3 + $0x70] sm:$0xff]
    %v111 = vld [vmem:[#allocation3 + $0x78] sm:$0xff]
    %v112 = vld [vmem:[#allocation6] sm:$0xff]
    %v113 = vld [vmem:[#allocation6 + $0x8] sm:$0xff]
    %v114 = vld [vmem:[#allocation6 + $0x10] sm:$0xff]
    %v115 = vld [vmem:[#allocation6 + $0x18] sm:$0xff]
    %v116 = vld [vmem:[#allocation6 + $0x20] sm:$0xff]
    %v117 = vld [vmem:[#allocation6 + $0x28] sm:$0xff]
    %v118 = vld [vmem:[#allocation6 + $0x30] sm:$0xff]
    %v119 = vld [vmem:[#allocation6 + $0x38] sm:$0xff]
    %v120 = vld [vmem:[#allocation6 + $0x40] sm:$0xff]
    %v121 = vld [vmem:[#allocation6 + $0x48] sm:$0xff]
    %v122 = vld [vmem:[#allocation6 + $0x50] sm:$0xff]
    %v123 = vld [vmem:[#allocation6 + $0x58] sm:$0xff]
    %v124 = vld [vmem:[#allocation6 + $0x60] sm:$0xff]
    %v125 = vld [vmem:[#allocation6 + $0x68] sm:$0xff]
    %v126 = vld [vmem:[#allocation6 + $0x70] sm:$0xff]
    %v127 = vld [vmem:[#allocation6 + $0x78] sm:$0xff]
    %v128 = vmax.f32 %v96, 0.0
    %v129 = vmax.f32 %v97, 0.0
    %v130 = vmax.f32 %v98, 0.0
    %v131 = vmax.f32 %v99, 0.0
    %v132 = vmax.f32 %v100, 0.0
    %v133 = vmax.f32 %v101, 0.0
    %v134 = vmax.f32 %v102, 0.0
    %v135 = vmax.f32 %v103, 0.0
    %v136 = vmax.f32 %v104, 0.0
    %v137 = vmax.f32 %v105, 0.0
    %v138 = vmax.f32 %v106, 0.0
    %v139 = vmax.f32 %v107, 0.0
    %v140 = vmax.f32 %v108, 0.0
    %v141 = vmax.f32 %v109, 0.0
    %v142 = vmax.f32 %v110, 0.0
    %v143 = vmax.f32 %v111, 0.0
    %v144 = vmul.f32 %v96, %v112
    %v145 = vmul.f32 %v97, %v113
    %v146 = vmul.f32 %v98, %v114
    %v147 = vmul.f32 %v99, %v115
    %v148 = vmul.f32 %v100, %v116
    %v149 = vmul.f32 %v101, %v117
    %v150 = vmul.f32 %v102, %v118
    %v151 = vmul.f32 %v103, %v119
    %v152 = vmul.f32 %v104, %v120
    %v153 = vmul.f32 %v105, %v121
    %v154 = vmul.f32 %v106, %v122
    %v155 = vmul.f32 %v107, %v123
    %v156 = vmul.f32 %v108, %v124
    %v157 = vmul.f32 %v109, %v125
    %v158 = vmul.f32 %v110, %v126
    %v159 = vmul.f32 %v111, %v127
    %v160 = vsub.f32 %v128, %v144
    %v161 = vsub.f32 %v129, %v145
    %v162 = vsub.f32 %v130, %v146
    %v163 = vsub.f32 %v131, %v147
    %v164 = vsub.f32 %v132, %v148
    %v165 = vsub.f32 %v133, %v149
    %v166 = vsub.f32 %v134, %v150
    %v167 = vsub.f32 %v135, %v151
    %v168 = vsub.f32 %v136, %v152
    %v169 = vsub.f32 %v137, %v153
    %v170 = vsub.f32 %v138, %v154
    %v171 = vsub.f32 %v139, %v155
    %v172 = vsub.f32 %v140, %v156
    %v173 = vsub.f32 %v141, %v157
    %v174 = vsub.f32 %v142, %v158
    %v175 = vsub.f32 %v143, %v159
    %v176 = vand.u32 2147483647, %v96
    %v177 = vand.u32 2147483647, %v97
    %v178 = vand.u32 2147483647, %v98
    %v179 = vand.u32 2147483647, %v99
    %v180 = vand.u32 2147483647, %v100
    %v181 = vand.u32 2147483647, %v101
    %v182 = vand.u32 2147483647, %v102
    %v183 = vand.u32 2147483647, %v103
    %v184 = vand.u32 2147483647, %v104
    %v185 = vand.u32 2147483647, %v105
    %v186 = vand.u32 2147483647, %v106
    %v187 = vand.u32 2147483647, %v107
    %v188 = vand.u32 2147483647, %v108
    %v189 = vand.u32 2147483647, %v109
    %v190 = vand.u32 2147483647, %v110
    %v191 = vand.u32 2147483647, %v111
    %v192 = vsub.f32 0.0, %v176
    %v193 = vsub.f32 0.0, %v177
    %v194 = vsub.f32 0.0, %v178
    %v195 = vsub.f32 0.0, %v179
    %v196 = vsub.f32 0.0, %v180
    %v197 = vsub.f32 0.0, %v181
    %v198 = vsub.f32 0.0, %v182
    %v199 = vsub.f32 0.0, %v183
    %v200 = vsub.f32 0.0, %v184
    %v201 = vsub.f32 0.0, %v185
    %v202 = vsub.f32 0.0, %v186
    %v203 = vsub.f32 0.0, %v187
    %v204 = vsub.f32 0.0, %v188
    %v205 = vsub.f32 0.0, %v189
    %v206 = vsub.f32 0.0, %v190
    %v207 = vsub.f32 0.0, %v191
    %v208 = vmul.f32 %v192, 1.442695
    %v209 = vpow.pop %v208
    %v210 = vmul.f32 %v193, 1.442695
    %v211 = vpow.pop %v210
    %v212 = vmul.f32 %v194, 1.442695
    %v213 = vpow.pop %v212
    %v214 = vmul.f32 %v195, 1.442695
    %v215 = vpow.pop %v214
    %v216 = vmul.f32 %v196, 1.442695
    %v217 = vpow.pop %v216
    %v218 = vmul.f32 %v197, 1.442695
    %v219 = vpow.pop %v218
    %v220 = vmul.f32 %v198, 1.442695
    %v221 = vpow.pop %v220
    %v222 = vmul.f32 %v199, 1.442695
    %v223 = vpow.pop %v222
    %v224 = vmul.f32 %v200, 1.442695
    %v225 = vpow.pop %v224
    %v226 = vmul.f32 %v201, 1.442695
    %v227 = vpow.pop %v226
    %v228 = vmul.f32 %v202, 1.442695
    %v229 = vpow.pop %v228
    %v230 = vmul.f32 %v203, 1.442695
    %v231 = vpow.pop %v230
    %v232 = vmul.f32 %v204, 1.442695
    %v233 = vpow.pop %v232
    %v234 = vmul.f32 %v205, 1.442695
    %v235 = vpow.pop %v234
    %v236 = vmul.f32 %v206, 1.442695
    %v237 = vpow.pop %v236
    %v238 = vmul.f32 %v207, 1.442695
    %v239 = vpow.pop %v238
    %v240 = vadd.f32 %v209, 1.0
    %v241 = vlog2.pop %v240
    %v242 = vmul.f32 %v241, 0.6931472
    %v243 = vmul.f32 -0.5, %v209
    %v244 = vadd.f32 %v243, 1.0
    %v245 = vmul.f32 %v244, %v209
    %v246 = vand.u32 2147483647, %v209
    %vm247 = vcmp.lt.f32.partialorder %v246, 0.0004427343
    %v248 = vsel %vm247, %v245, %v242
    %v249 = vadd.f32 %v211, 1.0
    %v250 = vlog2.pop %v249
    %v251 = vmul.f32 %v250, 0.6931472
    %v252 = vmul.f32 -0.5, %v211
    %v253 = vadd.f32 %v252, 1.0
    %v254 = vmul.f32 %v253, %v211
    %v255 = vand.u32 2147483647, %v211
    %vm256 = vcmp.lt.f32.partialorder %v255, 0.0004427343
    %v257 = vsel %vm256, %v254, %v251
    %v258 = vadd.f32 %v213, 1.0
    %v259 = vlog2.pop %v258
    %v260 = vmul.f32 %v259, 0.6931472
    %v261 = vmul.f32 -0.5, %v213
    %v262 = vadd.f32 %v261, 1.0
    %v263 = vmul.f32 %v262, %v213
    %v264 = vand.u32 2147483647, %v213
    %vm265 = vcmp.lt.f32.partialorder %v264, 0.0004427343
    %v266 = vsel %vm265, %v263, %v260
    %v267 = vadd.f32 %v215, 1.0
    %v268 = vlog2.pop %v267
    %v269 = vmul.f32 %v268, 0.6931472
    %v270 = vmul.f32 -0.5, %v215
    %v271 = vadd.f32 %v270, 1.0
    %v272 = vmul.f32 %v271, %v215
    %v273 = vand.u32 2147483647, %v215
    %vm274 = vcmp.lt.f32.partialorder %v273, 0.0004427343
    %v275 = vsel %vm274, %v272, %v269
    %v276 = vadd.f32 %v217, 1.0
    %v277 = vlog2.pop %v276
    %v278 = vmul.f32 %v277, 0.6931472
    %v279 = vmul.f32 -0.5, %v217
    %v280 = vadd.f32 %v279, 1.0
    %v281 = vmul.f32 %v280, %v217
    %v282 = vand.u32 2147483647, %v217
    %vm283 = vcmp.lt.f32.partialorder %v282, 0.0004427343
    %v284 = vsel %vm283, %v281, %v278
    %v285 = vadd.f32 %v219, 1.0
    %v286 = vlog2.pop %v285
    %v287 = vmul.f32 %v286, 0.6931472
    %v288 = vmul.f32 -0.5, %v219
    %v289 = vadd.f32 %v288, 1.0
    %v290 = vmul.f32 %v289, %v219
    %v291 = vand.u32 2147483647, %v219
    %vm292 = vcmp.lt.f32.partialorder %v291, 0.0004427343
    %v293 = vsel %vm292, %v290, %v287
    %v294 = vadd.f32 %v221, 1.0
    %v295 = vlog2.pop %v294
    %v296 = vmul.f32 %v295, 0.6931472
    %v297 = vmul.f32 -0.5, %v221
    %v298 = vadd.f32 %v297, 1.0
    %v299 = vmul.f32 %v298, %v221
    %v300 = vand.u32 2147483647, %v221
    %vm301 = vcmp.lt.f32.partialorder %v300, 0.0004427343
    %v302 = vsel %vm301, %v299, %v296
    %v303 = vadd.f32 %v223, 1.0
    %v304 = vlog2.pop %v303
    %v305 = vmul.f32 %v304, 0.6931472
    %v306 = vmul.f32 -0.5, %v223
    %v307 = vadd.f32 %v306, 1.0
    %v308 = vmul.f32 %v307, %v223
    %v309 = vand.u32 2147483647, %v223
    %vm310 = vcmp.lt.f32.partialorder %v309, 0.0004427343
    %v311 = vsel %vm310, %v308, %v305
    %v312 = vadd.f32 %v225, 1.0
    %v313 = vlog2.pop %v312
    %v314 = vmul.f32 %v313, 0.6931472
    %v315 = vmul.f32 -0.5, %v225
    %v316 = vadd.f32 %v315, 1.0
    %v317 = vmul.f32 %v316, %v225
    %v318 = vand.u32 2147483647, %v225
    %vm319 = vcmp.lt.f32.partialorder %v318, 0.0004427343
    %v320 = vsel %vm319, %v317, %v314
    %v321 = vadd.f32 %v227, 1.0
    %v322 = vlog2.pop %v321
    %v323 = vmul.f32 %v322, 0.6931472
    %v324 = vmul.f32 -0.5, %v227
    %v325 = vadd.f32 %v324, 1.0
    %v326 = vmul.f32 %v325, %v227
    %v327 = vand.u32 2147483647, %v227
    %vm328 = vcmp.lt.f32.partialorder %v327, 0.0004427343
    %v329 = vsel %vm328, %v326, %v323
    %v330 = vadd.f32 %v229, 1.0
    %v331 = vlog2.pop %v330
    %v332 = vmul.f32 %v331, 0.6931472
    %v333 = vmul.f32 -0.5, %v229
    %v334 = vadd.f32 %v333, 1.0
    %v335 = vmul.f32 %v334, %v229
    %v336 = vand.u32 2147483647, %v229
    %vm337 = vcmp.lt.f32.partialorder %v336, 0.0004427343
    %v338 = vsel %vm337, %v335, %v332
    %v339 = vadd.f32 %v231, 1.0
    %v340 = vlog2.pop %v339
    %v341 = vmul.f32 %v340, 0.6931472
    %v342 = vmul.f32 -0.5, %v231
    %v343 = vadd.f32 %v342, 1.0
    %v344 = vmul.f32 %v343, %v231
    %v345 = vand.u32 2147483647, %v231
    %vm346 = vcmp.lt.f32.partialorder %v345, 0.0004427343
    %v347 = vsel %vm346, %v344, %v341
    %v348 = vadd.f32 %v233, 1.0
    %v349 = vlog2.pop %v348
    %v350 = vmul.f32 %v349, 0.6931472
    %v351 = vmul.f32 -0.5, %v233
    %v352 = vadd.f32 %v351, 1.0
    %v353 = vmul.f32 %v352, %v233
    %v354 = vand.u32 2147483647, %v233
    %vm355 = vcmp.lt.f32.partialorder %v354, 0.0004427343
    %v356 = vsel %vm355, %v353, %v350
    %v357 = vadd.f32 %v235, 1.0
    %v358 = vlog2.pop %v357
    %v359 = vmul.f32 %v358, 0.6931472
    %v360 = vmul.f32 -0.5, %v235
    %v361 = vadd.f32 %v360, 1.0
    %v362 = vmul.f32 %v361, %v235
    %v363 = vand.u32 2147483647, %v235
    %vm364 = vcmp.lt.f32.partialorder %v363, 0.0004427343
    %v365 = vsel %vm364, %v362, %v359
    %v366 = vadd.f32 %v237, 1.0
    %v367 = vlog2.pop %v366
    %v368 = vmul.f32 %v367, 0.6931472
    %v369 = vmul.f32 -0.5, %v237
    %v370 = vadd.f32 %v369, 1.0
    %v371 = vmul.f32 %v370, %v237
    %v372 = vand.u32 2147483647, %v237
    %vm373 = vcmp.lt.f32.partialorder %v372, 0.0004427343
    %v374 = vsel %vm373, %v371, %v368
    %v375 = vadd.f32 %v239, 1.0
    %v376 = vlog2.pop %v375
    %v377 = vmul.f32 %v376, 0.6931472
    %v378 = vmul.f32 -0.5, %v239
    %v379 = vadd.f32 %v378, 1.0
    %v380 = vmul.f32 %v379, %v239
    %v381 = vand.u32 2147483647, %v239
    %vm382 = vcmp.lt.f32.partialorder %v381, 0.0004427343
    %v383 = vsel %vm382, %v380, %v377
    %v384 = vadd.f32 %v160, %v248
    %v385 = vadd.f32 %v161, %v257
    %v386 = vadd.f32 %v162, %v266
    %v387 = vadd.f32 %v163, %v275
    %v388 = vadd.f32 %v164, %v284
    %v389 = vadd.f32 %v165, %v293
    %v390 = vadd.f32 %v166, %v302
    %v391 = vadd.f32 %v167, %v311
    %v392 = vadd.f32 %v168, %v320
    %v393 = vadd.f32 %v169, %v329
    %v394 = vadd.f32 %v170, %v338
    %v395 = vadd.f32 %v171, %v347
    %v396 = vadd.f32 %v172, %v356
    %v397 = vadd.f32 %v173, %v365
    %v398 = vadd.f32 %v174, %v374
    %v399 = vadd.f32 %v175, %v383
    %v400 = vsub.f32 0.0, %v384
    %v401 = vsub.f32 0.0, %v385
    %v402 = vsub.f32 0.0, %v386
    %v403 = vsub.f32 0.0, %v387
    %v404 = vsub.f32 0.0, %v388
    %v405 = vsub.f32 0.0, %v389
    %v406 = vsub.f32 0.0, %v390
    %v407 = vsub.f32 0.0, %v391
    %v408 = vsub.f32 0.0, %v392
    %v409 = vsub.f32 0.0, %v393
    %v410 = vsub.f32 0.0, %v394
    %v411 = vsub.f32 0.0, %v395
    %v412 = vsub.f32 0.0, %v396
    %v413 = vsub.f32 0.0, %v397
    %v414 = vsub.f32 0.0, %v398
    %v415 = vsub.f32 0.0, %v399
    %v416 = vmul.f32 %v400, 1.442695
    %v417 = vpow.pop %v416
    %v418 = vmul.f32 %v401, 1.442695
    %v419 = vpow.pop %v418
    %v420 = vmul.f32 %v402, 1.442695
    %v421 = vpow.pop %v420
    %v422 = vmul.f32 %v403, 1.442695
    %v423 = vpow.pop %v422
    %v424 = vmul.f32 %v404, 1.442695
    %v425 = vpow.pop %v424
    %v426 = vmul.f32 %v405, 1.442695
    %v427 = vpow.pop %v426
    %v428 = vmul.f32 %v406, 1.442695
    %v429 = vpow.pop %v428
    %v430 = vmul.f32 %v407, 1.442695
    %v431 = vpow.pop %v430
    %v432 = vmul.f32 %v408, 1.442695
    %v433 = vpow.pop %v432
    %v434 = vmul.f32 %v409, 1.442695
    %v435 = vpow.pop %v434
    %v436 = vmul.f32 %v410, 1.442695
    %v437 = vpow.pop %v436
    %v438 = vmul.f32 %v411, 1.442695
    %v439 = vpow.pop %v438
    %v440 = vmul.f32 %v412, 1.442695
    %v441 = vpow.pop %v440
    %v442 = vmul.f32 %v413, 1.442695
    %v443 = vpow.pop %v442
    %v444 = vmul.f32 %v414, 1.442695
    %v445 = vpow.pop %v444
    %v446 = vmul.f32 %v415, 1.442695
    %v447 = vpow.pop %v446
    %v448 = vsub.f32 1.0, %v417
    %v449 = vsub.f32 1.0, %v419
    %v450 = vsub.f32 1.0, %v421
    %v451 = vsub.f32 1.0, %v423
    %v452 = vsub.f32 1.0, %v425
    %v453 = vsub.f32 1.0, %v427
    %v454 = vsub.f32 1.0, %v429
    %v455 = vsub.f32 1.0, %v431
    %v456 = vsub.f32 1.0, %v433
    %v457 = vsub.f32 1.0, %v435
    %v458 = vsub.f32 1.0, %v437
    %v459 = vsub.f32 1.0, %v439
    %v460 = vsub.f32 1.0, %v441
    %v461 = vsub.f32 1.0, %v443
    %v462 = vsub.f32 1.0, %v445
    %v463 = vsub.f32 1.0, %v447
    %v464 = vmul.f32 %v448, %v448
    %v465 = vmul.f32 %v449, %v449
    %v466 = vmul.f32 %v450, %v450
    %v467 = vmul.f32 %v451, %v451
    %v468 = vmul.f32 %v452, %v452
    %v469 = vmul.f32 %v453, %v453
    %v470 = vmul.f32 %v454, %v454
    %v471 = vmul.f32 %v455, %v455
    %v472 = vmul.f32 %v456, %v456
    %v473 = vmul.f32 %v457, %v457
    %v474 = vmul.f32 %v458, %v458
    %v475 = vmul.f32 %v459, %v459
    %v476 = vmul.f32 %v460, %v460
    %v477 = vmul.f32 %v461, %v461
    %v478 = vmul.f32 %v462, %v462
    %v479 = vmul.f32 %v463, %v463
    %v480 = vmul.f32 %v464, %v384
    %v481 = vmul.f32 %v465, %v385
    %v482 = vmul.f32 %v466, %v386
    %v483 = vmul.f32 %v467, %v387
    %v484 = vmul.f32 %v468, %v388
    %v485 = vmul.f32 %v469, %v389
    %v486 = vmul.f32 %v470, %v390
    %v487 = vmul.f32 %v471, %v391
    %v488 = vmul.f32 %v472, %v392
    %v489 = vmul.f32 %v473, %v393
    %v490 = vmul.f32 %v474, %v394
    %v491 = vmul.f32 %v475, %v395
    %v492 = vmul.f32 %v476, %v396
    %v493 = vmul.f32 %v477, %v397
    %v494 = vmul.f32 %v478, %v398
    %v495 = vmul.f32 %v479, %v399
    %s496 = sadd.s32 0, 0
    %p497 = scmp.eq.s32.totalorder %s496, 0
    %p498 = scmp.ne.s32.totalorder %s496, 0
    // Predicated region
    $region22: #{tpu_custom_call.1} parent=1 // pred_check
      %p499 = pneg %p498
    $region23: #{tpu_custom_call.1} parent=1 // pred_check_branch
      %501 = sbr.rel (%p499) target = $region25
    $region24: #{tpu_custom_call.1} parent=1 // pred_region
      %v502 = vld [vmem:[#allocation2] sm:$0xff]
      %v503 = vld [vmem:[#allocation2 + $0x8] sm:$0xff]
      %v504 = vld [vmem:[#allocation2 + $0x10] sm:$0xff]
      %v505 = vld [vmem:[#allocation2 + $0x18] sm:$0xff]
      %v506 = vld [vmem:[#allocation2 + $0x20] sm:$0xff]
      %v507 = vld [vmem:[#allocation2 + $0x28] sm:$0xff]
      %v508 = vld [vmem:[#allocation2 + $0x30] sm:$0xff]
      %v509 = vld [vmem:[#allocation2 + $0x38] sm:$0xff]
      %v510 = vld [vmem:[#allocation2 + $0x40] sm:$0xff]
      %v511 = vld [vmem:[#allocation2 + $0x48] sm:$0xff]
      %v512 = vld [vmem:[#allocation2 + $0x50] sm:$0xff]
      %v513 = vld [vmem:[#allocation2 + $0x58] sm:$0xff]
      %v514 = vld [vmem:[#allocation2 + $0x60] sm:$0xff]
      %v515 = vld [vmem:[#allocation2 + $0x68] sm:$0xff]
      %v516 = vld [vmem:[#allocation2 + $0x70] sm:$0xff]
      %v517 = vld [vmem:[#allocation2 + $0x78] sm:$0xff]
      %534 = vst [vmem:[#allocation1] ss:$2 sm:$0xff] %v480
      %s535 = scalar_lea.vmem [#allocation1], 1
      %536 = vst [vmem:[%s535] ss:$2 sm:$0xff] %v482
      %s537 = scalar_lea.vmem [#allocation1], 16
      %538 = vst [vmem:[%s537] ss:$2 sm:$0xff] %v481
      %s539 = scalar_lea.vmem [#allocation1], 17
      %540 = vst [vmem:[%s539] ss:$2 sm:$0xff] %v483
      %s541 = scalar_lea.vmem [#allocation1], 32
      %542 = vst [vmem:[%s541] ss:$2 sm:$0xff] %v484
      %s543 = scalar_lea.vmem [#allocation1], 33
      %544 = vst [vmem:[%s543] ss:$2 sm:$0xff] %v486
      %s545 = scalar_lea.vmem [#allocation1], 48
      %546 = vst [vmem:[%s545] ss:$2 sm:$0xff] %v485
      %s547 = scalar_lea.vmem [#allocation1], 49
      %548 = vst [vmem:[%s547] ss:$2 sm:$0xff] %v487
      %v549 = vld.sshfl [vmem:[#allocation1] sm:$0xff pattern:$0x75316420]
      %v550 = vld.sshfl [vmem:[#allocation1 + $0x8] sm:$0xff pattern:$0x75316420]
      %v551 = vld.sshfl [vmem:[#allocation1 + $0x10] sm:$0xff pattern:$0x75316420]
      %v552 = vld.sshfl [vmem:[#allocation1 + $0x18] sm:$0xff pattern:$0x75316420]
      %v553 = vld.sshfl [vmem:[#allocation1 + $0x20] sm:$0xff pattern:$0x75316420]
      %v554 = vld.sshfl [vmem:[#allocation1 + $0x28] sm:$0xff pattern:$0x75316420]
      %v555 = vld.sshfl [vmem:[#allocation1 + $0x30] sm:$0xff pattern:$0x75316420]
      %v556 = vld.sshfl [vmem:[#allocation1 + $0x38] sm:$0xff pattern:$0x75316420]
      %557 = vst [vmem:[#allocation1] ss:$2 sm:$0xff] %v488
      %558 = vst [vmem:[%s535] ss:$2 sm:$0xff] %v490
      %559 = vst [vmem:[%s537] ss:$2 sm:$0xff] %v489
      %560 = vst [vmem:[%s539] ss:$2 sm:$0xff] %v491
      %561 = vst [vmem:[%s541] ss:$2 sm:$0xff] %v492
      %562 = vst [vmem:[%s543] ss:$2 sm:$0xff] %v494
      %563 = vst [vmem:[%s545] ss:$2 sm:$0xff] %v493
      %564 = vst [vmem:[%s547] ss:$2 sm:$0xff] %v495
      %v565 = vld.sshfl [vmem:[#allocation1] sm:$0xff pattern:$0x75316420]
      %v566 = vld.sshfl [vmem:[#allocation1 + $0x8] sm:$0xff pattern:$0x75316420]
      %v567 = vld.sshfl [vmem:[#allocation1 + $0x10] sm:$0xff pattern:$0x75316420]
      %v568 = vld.sshfl [vmem:[#allocation1 + $0x18] sm:$0xff pattern:$0x75316420]
      %v569 = vld.sshfl [vmem:[#allocation1 + $0x20] sm:$0xff pattern:$0x75316420]
      %v570 = vld.sshfl [vmem:[#allocation1 + $0x28] sm:$0xff pattern:$0x75316420]
      %v571 = vld.sshfl [vmem:[#allocation1 + $0x30] sm:$0xff pattern:$0x75316420]
      %v572 = vld.sshfl [vmem:[#allocation1 + $0x38] sm:$0xff pattern:$0x75316420]
      %v589 = vadd.f32 %v502, %v549
      %v590 = vadd.f32 %v503, %v550
      %v591 = vadd.f32 %v504, %v551
      %v592 = vadd.f32 %v505, %v552
      %v593 = vadd.f32 %v506, %v553
      %v594 = vadd.f32 %v507, %v554
      %v595 = vadd.f32 %v508, %v555
      %v596 = vadd.f32 %v509, %v556
      %v597 = vadd.f32 %v510, %v565
      %v598 = vadd.f32 %v511, %v566
      %v599 = vadd.f32 %v512, %v567
      %v600 = vadd.f32 %v513, %v568
      %v601 = vadd.f32 %v514, %v569
      %v602 = vadd.f32 %v515, %v570
      %v603 = vadd.f32 %v516, %v571
      %v604 = vadd.f32 %v517, %v572
      %605 = vst [vmem:[#allocation2] sm:$0xff] %v589
      %606 = vst [vmem:[#allocation2 + $0x8] sm:$0xff] %v590
      %607 = vst [vmem:[#allocation2 + $0x10] sm:$0xff] %v591
      %608 = vst [vmem:[#allocation2 + $0x18] sm:$0xff] %v592
      %609 = vst [vmem:[#allocation2 + $0x20] sm:$0xff] %v593
      %610 = vst [vmem:[#allocation2 + $0x28] sm:$0xff] %v594
      %611 = vst [vmem:[#allocation2 + $0x30] sm:$0xff] %v595
      %612 = vst [vmem:[#allocation2 + $0x38] sm:$0xff] %v596
      %613 = vst [vmem:[#allocation2 + $0x40] sm:$0xff] %v597
      %614 = vst [vmem:[#allocation2 + $0x48] sm:$0xff] %v598
      %615 = vst [vmem:[#allocation2 + $0x50] sm:$0xff] %v599
      %616 = vst [vmem:[#allocation2 + $0x58] sm:$0xff] %v600
      %617 = vst [vmem:[#allocation2 + $0x60] sm:$0xff] %v601
      %618 = vst [vmem:[#allocation2 + $0x68] sm:$0xff] %v602
      %619 = vst [vmem:[#allocation2 + $0x70] sm:$0xff] %v603
      %620 = vst [vmem:[#allocation2 + $0x78] sm:$0xff] %v604
    $region25: #{tpu_custom_call.1} parent=1 // pred_fallthru
      _
    // Predicated region
    $region26: #{tpu_custom_call.1} parent=1 // pred_check
      %p621 = pneg %p497
    $region27: #{tpu_custom_call.1} parent=1 // pred_check_branch
      %623 = sbr.rel (%p621) target = $region29
    $region28: #{tpu_custom_call.1} parent=1 // pred_region
      %v624 = vlaneseq
      %v625 = vshrl.u32 %v624, 7
      %v626 = vadd.s32 %v625, 8
      %v627 = vadd.s32 %v625, 16
      %v628 = vadd.s32 %v625, 24
      %v629 = vld [vmem:[#allocation2] sm:$0xff]
      %v630 = vld [vmem:[#allocation2 + $0x8] sm:$0xff]
      %v631 = vld [vmem:[#allocation2 + $0x10] sm:$0xff]
      %v632 = vld [vmem:[#allocation2 + $0x18] sm:$0xff]
      %v633 = vld [vmem:[#allocation2 + $0x20] sm:$0xff]
      %v634 = vld [vmem:[#allocation2 + $0x28] sm:$0xff]
      %v635 = vld [vmem:[#allocation2 + $0x30] sm:$0xff]
      %v636 = vld [vmem:[#allocation2 + $0x38] sm:$0xff]
      %v637 = vld [vmem:[#allocation2 + $0x40] sm:$0xff]
      %v638 = vld [vmem:[#allocation2 + $0x48] sm:$0xff]
      %v639 = vld [vmem:[#allocation2 + $0x50] sm:$0xff]
      %v640 = vld [vmem:[#allocation2 + $0x58] sm:$0xff]
      %v641 = vld [vmem:[#allocation2 + $0x60] sm:$0xff]
      %v642 = vld [vmem:[#allocation2 + $0x68] sm:$0xff]
      %v643 = vld [vmem:[#allocation2 + $0x70] sm:$0xff]
      %v644 = vld [vmem:[#allocation2 + $0x78] sm:$0xff]
      %vm645 = vcmp.lt.s32.totalorder %v625, 4
      %vm646 = vcmp.lt.s32.totalorder %v626, 4
      %vm647 = vcmp.lt.s32.totalorder %v627, 4
      %vm648 = vcmp.lt.s32.totalorder %v628, 4
      %665 = vst [vmem:[#allocation1] ss:$2 sm:$0xff] %v480
      %s666 = scalar_lea.vmem [#allocation1], 1
      %667 = vst [vmem:[%s666] ss:$2 sm:$0xff] %v482
      %s668 = scalar_lea.vmem [#allocation1], 16
      %669 = vst [vmem:[%s668] ss:$2 sm:$0xff] %v481
      %s670 = scalar_lea.vmem [#allocation1], 17
      %671 = vst [vmem:[%s670] ss:$2 sm:$0xff] %v483
      %s672 = scalar_lea.vmem [#allocation1], 32
      %673 = vst [vmem:[%s672] ss:$2 sm:$0xff] %v484
      %s674 = scalar_lea.vmem [#allocation1], 33
      %675 = vst [vmem:[%s674] ss:$2 sm:$0xff] %v486
      %s676 = scalar_lea.vmem [#allocation1], 48
      %677 = vst [vmem:[%s676] ss:$2 sm:$0xff] %v485
      %s678 = scalar_lea.vmem [#allocation1], 49
      %679 = vst [vmem:[%s678] ss:$2 sm:$0xff] %v487
      %v680 = vld.sshfl [vmem:[#allocation1] sm:$0xff pattern:$0x75316420]
      %v681 = vld.sshfl [vmem:[#allocation1 + $0x8] sm:$0xff pattern:$0x75316420]
      %v682 = vld.sshfl [vmem:[#allocation1 + $0x10] sm:$0xff pattern:$0x75316420]
      %v683 = vld.sshfl [vmem:[#allocation1 + $0x18] sm:$0xff pattern:$0x75316420]
      %v684 = vld.sshfl [vmem:[#allocation1 + $0x20] sm:$0xff pattern:$0x75316420]
      %v685 = vld.sshfl [vmem:[#allocation1 + $0x28] sm:$0xff pattern:$0x75316420]
      %v686 = vld.sshfl [vmem:[#allocation1 + $0x30] sm:$0xff pattern:$0x75316420]
      %v687 = vld.sshfl [vmem:[#allocation1 + $0x38] sm:$0xff pattern:$0x75316420]
      %688 = vst [vmem:[#allocation1] ss:$2 sm:$0xff] %v488
      %689 = vst [vmem:[%s666] ss:$2 sm:$0xff] %v490
      %690 = vst [vmem:[%s668] ss:$2 sm:$0xff] %v489
      %691 = vst [vmem:[%s670] ss:$2 sm:$0xff] %v491
      %692 = vst [vmem:[%s672] ss:$2 sm:$0xff] %v492
      %693 = vst [vmem:[%s674] ss:$2 sm:$0xff] %v494
      %694 = vst [vmem:[%s676] ss:$2 sm:$0xff] %v493
      %695 = vst [vmem:[%s678] ss:$2 sm:$0xff] %v495
      %v696 = vld.sshfl [vmem:[#allocation1] sm:$0xff pattern:$0x75316420]
      %v697 = vld.sshfl [vmem:[#allocation1 + $0x8] sm:$0xff pattern:$0x75316420]
      %v698 = vld.sshfl [vmem:[#allocation1 + $0x10] sm:$0xff pattern:$0x75316420]
      %v699 = vld.sshfl [vmem:[#allocation1 + $0x18] sm:$0xff pattern:$0x75316420]
      %v700 = vld.sshfl [vmem:[#allocation1 + $0x20] sm:$0xff pattern:$0x75316420]
      %v701 = vld.sshfl [vmem:[#allocation1 + $0x28] sm:$0xff pattern:$0x75316420]
      %v702 = vld.sshfl [vmem:[#allocation1 + $0x30] sm:$0xff pattern:$0x75316420]
      %v703 = vld.sshfl [vmem:[#allocation1 + $0x38] sm:$0xff pattern:$0x75316420]
      %v720 = vsel %vm645, %v680, 0.0
      %v721 = vsel %vm645, %v681, 0.0
      %v722 = vsel %vm645, %v682, 0.0
      %v723 = vsel %vm645, %v683, 0.0
      %v724 = vsel %vm646, %v684, 0.0
      %v725 = vsel %vm646, %v685, 0.0
      %v726 = vsel %vm646, %v686, 0.0
      %v727 = vsel %vm646, %v687, 0.0
      %v728 = vsel %vm647, %v696, 0.0
      %v729 = vsel %vm647, %v697, 0.0
      %v730 = vsel %vm647, %v698, 0.0
      %v731 = vsel %vm647, %v699, 0.0
      %v732 = vsel %vm648, %v700, 0.0
      %v733 = vsel %vm648, %v701, 0.0
      %v734 = vsel %vm648, %v702, 0.0
      %v735 = vsel %vm648, %v703, 0.0
      %v736 = vadd.f32 %v629, %v720
      %v737 = vadd.f32 %v630, %v721
      %v738 = vadd.f32 %v631, %v722
      %v739 = vadd.f32 %v632, %v723
      %v740 = vadd.f32 %v633, %v724
      %v741 = vadd.f32 %v634, %v725
      %v742 = vadd.f32 %v635, %v726
      %v743 = vadd.f32 %v636, %v727
      %v744 = vadd.f32 %v637, %v728
      %v745 = vadd.f32 %v638, %v729
      %v746 = vadd.f32 %v639, %v730
      %v747 = vadd.f32 %v640, %v731
      %v748 = vadd.f32 %v641, %v732
      %v749 = vadd.f32 %v642, %v733
      %v750 = vadd.f32 %v643, %v734
      %v751 = vadd.f32 %v644, %v735
      %752 = vst [vmem:[#allocation2] sm:$0xff] %v736
      %753 = vst [vmem:[#allocation2 + $0x8] sm:$0xff] %v737
      %754 = vst [vmem:[#allocation2 + $0x10] sm:$0xff] %v738
      %755 = vst [vmem:[#allocation2 + $0x18] sm:$0xff] %v739
      %756 = vst [vmem:[#allocation2 + $0x20] sm:$0xff] %v740
      %757 = vst [vmem:[#allocation2 + $0x28] sm:$0xff] %v741
      %758 = vst [vmem:[#allocation2 + $0x30] sm:$0xff] %v742
      %759 = vst [vmem:[#allocation2 + $0x38] sm:$0xff] %v743
      %760 = vst [vmem:[#allocation2 + $0x40] sm:$0xff] %v744
      %761 = vst [vmem:[#allocation2 + $0x48] sm:$0xff] %v745
      %762 = vst [vmem:[#allocation2 + $0x50] sm:$0xff] %v746
      %763 = vst [vmem:[#allocation2 + $0x58] sm:$0xff] %v747
      %764 = vst [vmem:[#allocation2 + $0x60] sm:$0xff] %v748
      %765 = vst [vmem:[#allocation2 + $0x68] sm:$0xff] %v749
      %766 = vst [vmem:[#allocation2 + $0x70] sm:$0xff] %v750
      %767 = vst [vmem:[#allocation2 + $0x78] sm:$0xff] %v751
    $region29: #{tpu_custom_call.1} parent=1 // pred_fallthru
      _
    // Predicated region
    $region30: #{tpu_custom_call.1} parent=1 // pred_check
      %p768 = pneg %p76
    $region31: #{tpu_custom_call.1} parent=1 // pred_check_branch
      %770 = sbr.rel (%p768) target = $region33
    $region32: #{tpu_custom_call.1} parent=1 // pred_region
      %v771 = vld [vmem:[#allocation2] sm:$0xff]
      %v772 = vld [vmem:[#allocation2 + $0x8] sm:$0xff]
      %v773 = vld [vmem:[#allocation2 + $0x10] sm:$0xff]
      %v774 = vld [vmem:[#allocation2 + $0x18] sm:$0xff]
      %v775 = vld [vmem:[#allocation2 + $0x20] sm:$0xff]
      %v776 = vld [vmem:[#allocation2 + $0x28] sm:$0xff]
      %v777 = vld [vmem:[#allocation2 + $0x30] sm:$0xff]
      %v778 = vld [vmem:[#allocation2 + $0x38] sm:$0xff]
      %v779 = vld [vmem:[#allocation2 + $0x40] sm:$0xff]
      %v780 = vld [vmem:[#allocation2 + $0x48] sm:$0xff]
      %v781 = vld [vmem:[#allocation2 + $0x50] sm:$0xff]
      %v782 = vld [vmem:[#allocation2 + $0x58] sm:$0xff]
      %v783 = vld [vmem:[#allocation2 + $0x60] sm:$0xff]
      %v784 = vld [vmem:[#allocation2 + $0x68] sm:$0xff]
      %v785 = vld [vmem:[#allocation2 + $0x70] sm:$0xff]
      %v786 = vld [vmem:[#allocation2 + $0x78] sm:$0xff]
      %v787 = vadd.f32 %v771, %v772
      %v788 = vadd.f32 %v787, %v773
      %v789 = vadd.f32 %v788, %v774
      %v790 = vadd.f32 %v789, %v775
      %v791 = vadd.f32 %v790, %v776
      %v792 = vadd.f32 %v791, %v777
      %v793 = vadd.f32 %v792, %v778
      %v794 = vadd.f32 %v793, %v779
      %v795 = vadd.f32 %v794, %v780
      %v796 = vadd.f32 %v795, %v781
      %v797 = vadd.f32 %v796, %v782
      %v798 = vadd.f32 %v797, %v783
      %v799 = vadd.f32 %v798, %v784
      %v800 = vadd.f32 %v799, %v785
      %v801 = vadd.f32 %v800, %v786
      %802 = vadd.xlane.f32.xlu0 %v801
      %v803 = vpop.xlane.xlu0 %802
      %v804 = vrot.slane %v803, 4
      %v805 = vadd.f32 %v803, %v804
      %v806 = vrot.slane %v805, 2
      %v807 = vadd.f32 %v805, %v806
      %v808 = vrot.slane %v807, 1
      %v809 = vadd.f32 %v807, %v808
      %s810 = vtos %v809
      %s811 = scalar_lea.smem [#allocation8], 0
      %812 = sst [smem:[%s811]] %s810
    $region33: #{tpu_custom_call.1} parent=1 // pred_fallthru
      _
    // Predicated region
    $region34: #{tpu_custom_call.1} parent=1 // pred_check
      _
    $region35: #{tpu_custom_call.1} parent=1 // pred_check_branch
      %814 = sbr.rel (0) target = $region37
    $region36: #{tpu_custom_call.1} parent=1 // pred_region
      %816 = vsyncadd [#allocation5], 0
      %s818 = sshll.u32 %s2, 4
      %s819 = int_to_ptr.hbm [resolvable:$true] %s818
      %821 = dma.smem_to_hbm [#allocation8], 16, %s819, [#allocation5]
    $region37: #{tpu_custom_call.1} parent=1 // pred_fallthru
      _
    // Predicated region
    $region38: #{tpu_custom_call.1} parent=1 // pred_check
      _
    $region39: #{tpu_custom_call.1} parent=1 // pred_check_branch
      %823 = sbr.rel (0) target = $region41
    $region40: #{tpu_custom_call.1} parent=1 // pred_region
      %825 = dma.done [#allocation5], 16
    $region41: #{tpu_custom_call.1} parent=1 // pred_fallthru
      _
    %826 = sfence
    %827 = vsyncpa [#allocation4], 1
    %828 = vsyncpa [#allocation7], 1
    %829 = vsyncpa [#allocation5], 1

</llo_original>
